<compile_context>
chip_gen: v7x
topology: tpu7x:2x2x1
jax: 0.10.0
libtpu: 0.0.40
codegen_flags: <defaults>
</compile_context>

<pallas_src>
import jax
import jax.numpy as jnp
from jax.experimental import pallas as pl
from jax.experimental.pallas import tpu as pltpu


def _round_up(n, m):
    return ((n + m - 1) // m) * m


def _sae_kernel(x_ref, w1_ref, b1_ref, w2_ref, b2_ref, out_ref):
    # Encoder: (tb, Fp) @ (Fp, Hp) -> (tb, Hp), bf16 operands, f32 MXU accumulation.
    h = jnp.dot(x_ref[...], w1_ref[...], preferred_element_type=jnp.float32)
    h = jax.nn.sigmoid(h + b1_ref[...])                      # f32 VPU/EUP math
    # Decoder: (tb, Hp) @ (Hp, Fp) -> (tb, Fp).
    y = jnp.dot(h.astype(w2_ref.dtype), w2_ref[...],
                preferred_element_type=jnp.float32)
    y = jax.nn.sigmoid(y + b2_ref[...])
    out_ref[...] = y.astype(out_ref.dtype)


def sparse_autoencoder_forward(x, w1_t, b1, w2_t, b2, *, batch_tile=None,
                               compute_dtype=jnp.bfloat16):
    """x: (B, F); w1_t: (F, H); b1: (H,); w2_t: (H, F); b2: (F,)."""
    B, F = x.shape
    H = w1_t.shape[1]
    out_dtype = x.dtype

    # ---- batch tile: real tiling so the grid has many steps (pipelining, megacore).
    tb = batch_tile if batch_tile is not None else 256
    tb = min(tb, _round_up(B, 8))
    tb = max(8, _round_up(tb, 8))
    Bp = _round_up(B, tb)

    # ---- lane padding: keep last dims 128-aligned (lane-dense stores, full MXU).
    Fp = _round_up(F, 128)
    Hp = _round_up(H, 128)

    cd = compute_dtype
    xp = x.astype(cd)
    if (Bp, Fp) != (B, F):
        xp = jnp.pad(xp, ((0, Bp - B), (0, Fp - F)))
    w1p = w1_t.astype(cd)
    w2p = w2_t.astype(cd)
    if (Fp, Hp) != (F, H):
        w1p = jnp.pad(w1p, ((0, Fp - F), (0, Hp - H)))
        # Padded hidden rows of W2 must be zero: padded hidden units evaluate to
        # sigmoid(0) = 0.5 and would otherwise contaminate the decoder output.
        w2p = jnp.pad(w2p, ((0, Hp - H), (0, Fp - F)))
    b1p = jnp.pad(b1.astype(jnp.float32), (0, Hp - H)).reshape(1, Hp)
    b2p = jnp.pad(b2.astype(jnp.float32), (0, Fp - F)).reshape(1, Fp)

    # ---- explicit VMEM budget: resident weights + double-buffered x/out tiles + h/y.
    wb = jnp.dtype(cd).itemsize
    ob = jnp.dtype(out_dtype).itemsize
    weight_bytes = 2 * Fp * Hp * wb + (Hp + Fp) * 4
    tile_bytes = (2 * tb * Fp * wb          # double-buffered x tiles
                  + 2 * tb * Fp * ob        # double-buffered out tiles
                  + tb * Hp * 4             # f32 hidden intermediate
                  + tb * Fp * 4)            # f32 decoder intermediate
    vmem_limit = int(min(max((weight_bytes + tile_bytes) * 5 // 4 + (1 << 20),
                             16 * 1024 * 1024),
                         96 * 1024 * 1024))

    out = pl.pallas_call(
        _sae_kernel,
        out_shape=jax.ShapeDtypeStruct((Bp, Fp), out_dtype),
        grid_spec=pltpu.PrefetchScalarGridSpec(
            num_scalar_prefetch=0,
            grid=(Bp // tb,),
            in_specs=[
                pl.BlockSpec((tb, Fp), lambda i: (i, 0)),   # x tile (streamed)
                pl.BlockSpec((Fp, Hp), lambda i: (0, 0)),   # W1^T (VMEM-resident)
                pl.BlockSpec((1, Hp), lambda i: (0, 0)),    # b1
                pl.BlockSpec((Hp, Fp), lambda i: (0, 0)),   # W2^T (VMEM-resident)
                pl.BlockSpec((1, Fp), lambda i: (0, 0)),    # b2
            ],
            out_specs=pl.BlockSpec((tb, Fp), lambda i: (i, 0)),
        ),
        compiler_params=pltpu.CompilerParams(
            dimension_semantics=("parallel",),
            vmem_limit_bytes=vmem_limit),
    )(xp, w1p, b1p, w2p, b2p)

    return out[:B, :F]


def _reference_forward(x, w1_t, b1, w2_t, b2, compute_dtype=jnp.bfloat16):
    """Pure-JAX reference with the same bf16-matmul / f32-accumulate semantics."""
    cd = compute_dtype
    h = jax.nn.sigmoid(
        jnp.dot(x.astype(cd), w1_t.astype(cd),
                preferred_element_type=jnp.float32) + b1.astype(jnp.float32))
    y = jax.nn.sigmoid(
        jnp.dot(h.astype(cd), w2_t.astype(cd),
                preferred_element_type=jnp.float32) + b2.astype(jnp.float32))
    return y


def _torch_linear_init(key, fan_in, fan_out, dtype=jnp.float32):
    """Deterministic init matching nn.Linear default: U(-1/sqrt(in), 1/sqrt(in))."""
    kw, kb = jax.random.split(key)
    bound = 1.0 / (fan_in ** 0.5)
    # PyTorch weight is (out, in); we store the transpose (in, out).
    w_t = jax.random.uniform(kw, (fan_in, fan_out), dtype, -bound, bound)
    b = jax.random.uniform(kb, (fan_out,), dtype, -bound, bound)
    return w_t, b


if __name__ == "__main__":
    def run_case(key, batch, feature_size, hidden_size):
        kx, k1, k2 = jax.random.split(key, 3)
        x = jax.random.normal(kx, (batch, feature_size), jnp.float32)
        w1_t, b1 = _torch_linear_init(k1, feature_size, hidden_size)
        w2_t, b2 = _torch_linear_init(k2, hidden_size, feature_size)

        out = jax.block_until_ready(
            sparse_autoencoder_forward(x, w1_t, b1, w2_t, b2))
        ref = _reference_forward(x, w1_t, b1, w2_t, b2)

        assert out.shape == (batch, feature_size)
        max_err = float(jnp.max(jnp.abs(out - ref)))
        assert jnp.allclose(out, ref, atol=2e-3, rtol=2e-3), max_err
        return out

    key = jax.random.PRNGKey(0)
    ka, kb = jax.random.split(key)
    run_case(ka, batch=8, feature_size=128, hidden_size=64)    # aligned F, padded H
    run_case(kb, batch=6, feature_size=100, hidden_size=56)    # exercises full padding path

    print("KERNEL_OK")
</pallas_src>

<mosaic_0001>
module attributes {stable_mosaic.version = 11 : i64} {
  func.func @_sae_kernel(%arg0: i32, %arg1: memref<8x128xbf16, #tpu.memory_space<vmem>>, %arg2: memref<128x128xbf16, #tpu.memory_space<vmem>>, %arg3: memref<1x128xf32, #tpu.memory_space<vmem>>, %arg4: memref<128x128xbf16, #tpu.memory_space<vmem>>, %arg5: memref<1x128xf32, #tpu.memory_space<vmem>>, %arg6: memref<8x128xf32, #tpu.memory_space<vmem>>) attributes {dimension_semantics = [#tpu.dimension_semantics<parallel>], iteration_bounds = array<i64: 1>, scalar_prefetch = 0 : i64, scratch_operands = 0 : i64, tpu.core_type = #tpu.core_type<tc>, window_params = [{transform_indices = @transform_0, window_bounds = array<i64: 8, 128>}, {pipeline_mode = #tpu.pipeline_mode<synchronous>, transform_indices = @transform_1, window_bounds = array<i64: 128, 128>}, {pipeline_mode = #tpu.pipeline_mode<synchronous>, transform_indices = @transform_2, window_bounds = array<i64: 1, 128>}, {pipeline_mode = #tpu.pipeline_mode<synchronous>, transform_indices = @transform_3, window_bounds = array<i64: 128, 128>}, {pipeline_mode = #tpu.pipeline_mode<synchronous>, transform_indices = @transform_4, window_bounds = array<i64: 1, 128>}, {transform_indices = @transform_5, window_bounds = array<i64: 8, 128>}]} {
    %c0 = arith.constant 0 : index
    %c0_0 = arith.constant 0 : index
    %0 = vector.load %arg1[%c0, %c0_0] : memref<8x128xbf16, #tpu.memory_space<vmem>>, vector<8x128xbf16>
    %c0_1 = arith.constant 0 : index
    %c0_2 = arith.constant 0 : index
    %1 = vector.load %arg2[%c0_1, %c0_2] : memref<128x128xbf16, #tpu.memory_space<vmem>>, vector<128x128xbf16>
    %cst = arith.constant dense<0.000000e+00> : vector<8x128xf32>
    %2 = tpu.matmul %0, %1, %cst {dimension_numbers = #tpu.dot_dimension_numbers<[1], [0], [0], [1], [0, 0, 1, 1], [], []>} : vector<8x128xbf16>, vector<128x128xbf16>, vector<8x128xf32> -> vector<8x128xf32>
    %c0_3 = arith.constant 0 : index
    %c0_4 = arith.constant 0 : index
    %3 = vector.load %arg3[%c0_3, %c0_4] : memref<1x128xf32, #tpu.memory_space<vmem>>, vector<1x128xf32>
    %4 = vector.broadcast %3 : vector<1x128xf32> to vector<8x128xf32>
    %5 = arith.addf %2, %4 : vector<8x128xf32>
    %6 = arith.negf %5 : vector<8x128xf32>
    %7 = math.exp %6 : vector<8x128xf32>
    %cst_5 = arith.constant 1.000000e+00 : f32
    %8 = vector.broadcast %cst_5 : f32 to vector<8x128xf32>
    %9 = arith.addf %8, %7 : vector<8x128xf32>
    %10 = arith.divf %8, %9 : vector<8x128xf32>
    %11 = arith.truncf %10 : vector<8x128xf32> to vector<8x128xbf16>
    %c0_6 = arith.constant 0 : index
    %c0_7 = arith.constant 0 : index
    %12 = vector.load %arg4[%c0_6, %c0_7] : memref<128x128xbf16, #tpu.memory_space<vmem>>, vector<128x128xbf16>
    %cst_8 = arith.constant dense<0.000000e+00> : vector<8x128xf32>
    %13 = tpu.matmul %11, %12, %cst_8 {dimension_numbers = #tpu.dot_dimension_numbers<[1], [0], [0], [1], [0, 0, 1, 1], [], []>} : vector<8x128xbf16>, vector<128x128xbf16>, vector<8x128xf32> -> vector<8x128xf32>
    %c0_9 = arith.constant 0 : index
    %c0_10 = arith.constant 0 : index
    %14 = vector.load %arg5[%c0_9, %c0_10] : memref<1x128xf32, #tpu.memory_space<vmem>>, vector<1x128xf32>
    %15 = vector.broadcast %14 : vector<1x128xf32> to vector<8x128xf32>
    %16 = arith.addf %13, %15 : vector<8x128xf32>
    %17 = arith.negf %16 : vector<8x128xf32>
    %18 = math.exp %17 : vector<8x128xf32>
    %cst_11 = arith.constant 1.000000e+00 : f32
    %19 = vector.broadcast %cst_11 : f32 to vector<8x128xf32>
    %20 = arith.addf %19, %18 : vector<8x128xf32>
    %21 = arith.divf %19, %20 : vector<8x128xf32>
    %c0_12 = arith.constant 0 : index
    %c0_13 = arith.constant 0 : index
    %22 = vector.load %arg6[%c0_12, %c0_13] : memref<8x128xf32, #tpu.memory_space<vmem>>, vector<8x128xf32>
    tpu.vector_store %arg6[%c0_12, %c0_13], %21 {strides = array<i32>} : memref<8x128xf32, #tpu.memory_space<vmem>>, vector<8x128xf32>,
    return
  }
  func.func @transform_0(%arg0: i32) -> (i32, i32) {
    %c0_i32 = arith.constant 0 : i32
    %c0_i32_0 = arith.constant 0 : i32
    return %arg0, %c0_i32 : i32, i32
  }
  func.func @transform_1(%arg0: i32) -> (i32, i32) {
    %c0_i32 = arith.constant 0 : i32
    %c0_i32_0 = arith.constant 0 : i32
    %c0_i32_1 = arith.constant 0 : i32
    return %c0_i32, %c0_i32_0 : i32, i32
  }
  func.func @transform_2(%arg0: i32) -> (i32, i32) {
    %c0_i32 = arith.constant 0 : i32
    %c0_i32_0 = arith.constant 0 : i32
    %c0_i32_1 = arith.constant 0 : i32
    return %c0_i32, %c0_i32_0 : i32, i32
  }
  func.func @transform_3(%arg0: i32) -> (i32, i32) {
    %c0_i32 = arith.constant 0 : i32
    %c0_i32_0 = arith.constant 0 : i32
    %c0_i32_1 = arith.constant 0 : i32
    return %c0_i32, %c0_i32_0 : i32, i32
  }
  func.func @transform_4(%arg0: i32) -> (i32, i32) {
    %c0_i32 = arith.constant 0 : i32
    %c0_i32_0 = arith.constant 0 : i32
    %c0_i32_1 = arith.constant 0 : i32
    return %c0_i32, %c0_i32_0 : i32, i32
  }
  func.func @transform_5(%arg0: i32) -> (i32, i32) {
    %c0_i32 = arith.constant 0 : i32
    %c0_i32_0 = arith.constant 0 : i32
    return %arg0, %c0_i32 : i32, i32
  }
}

</mosaic_0001>

<llo_original>
// kernel: tpu_custom_call.1
$region0: #{tpu_custom_call.1}
  #allocation0 [shape = 'u32[]', space=smem, size = 0x4, offset = 0x4, fixed_abs, tag = 'smem constant byte address 0x4 - core index']
  #allocation1 [shape = 'u32[144,128]{1,0:T(1,128)}', space=vmem, size = 0x12000, scoped, tag = 'internal scratch']
  %s0 = inlined_call_operand.hbm [shape: bf16[8,128], index: 0, kind: input, shape index: {}]
  %s1 = inlined_call_operand.hbm [shape: bf16[128,128], index: 1, kind: input, shape index: {}]
  %s2 = inlined_call_operand.vmem [shape: f32[1,128], index: 2, kind: input, shape index: {}]
  %s3 = inlined_call_operand.hbm [shape: bf16[128,128], index: 3, kind: input, shape index: {}]
  %s4 = inlined_call_operand.vmem [shape: f32[1,128], index: 4, kind: input, shape index: {}]
  %s5 = inlined_call_operand.hbm [shape: f32[8,128], index: 5, kind: output, shape index: {}]
  %s6 = sld [smem:[#allocation0]]
  $region42: #{tpu_custom_call.1} parent=0
    _
  %s8 = ssub.s32 1, %s6
  %s9 = scalar_select 0, %s8, %s6
  $region1: #{tpu_custom_call.1} parent=0
    #allocation2 [shape = 'u8[2048]{0}', space=vmem, size = 0x800, scoped, tag = 'input window, operand 0, single buffered']
    #allocation3 [shape = 's32[1]{0}', space=sflag, size = 0x4, scoped, tag = 'scoped memory for tpu_custom_call.1']
    #allocation4 [shape = 's32[1]{0}', space=sflag, size = 0x4, scoped, tag = 'scoped memory for tpu_custom_call.1']
    #allocation5 [shape = 'u8[32768]{0}', space=vmem, size = 0x8000, scoped, tag = 'input window, operand 1, single buffered']
    #allocation6 [shape = 's32[1]{0}', space=sflag, size = 0x4, scoped, tag = 'scoped memory for tpu_custom_call.1']
    #allocation7 [shape = 'u8[32768]{0}', space=vmem, size = 0x8000, scoped, tag = 'input window, operand 3, single buffered']
    #allocation8 [shape = 'u8[4096]{0}', space=vmem, size = 0x1000, scoped, tag = 'output window, operand 0, single buffered']
    %10 = vsyncpa [#allocation3], 0
    %11 = vsyncpa [#allocation6], 0
    %12 = vsyncpa [#allocation4], 0
    // Predicated region
    $region2: #{tpu_custom_call.1} parent=1 // pred_check
      _
    $region3: #{tpu_custom_call.1} parent=1 // pred_check_branch
      %14 = sbr.rel (0) target = $region5
    $region4: #{tpu_custom_call.1} parent=1 // pred_region
      %s16 = ssub.s32 64, 64
      %17 = vsyncadd [#allocation3], %s16
      %s19 = sshll.u32 [#allocation2], 4
      %s20 = int_to_ptr.vmem [resolvable:$true] %s19
      %22 = dma.hbm_to_vmem [thread:$0]  %s0, 64, %s20, [#allocation3]
    $region5: #{tpu_custom_call.1} parent=1 // pred_fallthru
      _
    // Predicated region
    $region6: #{tpu_custom_call.1} parent=1 // pred_check
      _
    $region7: #{tpu_custom_call.1} parent=1 // pred_check_branch
      %24 = sbr.rel (0) target = $region9
    $region8: #{tpu_custom_call.1} parent=1 // pred_region
      %s26 = ssub.s32 1024, 1024
      %27 = vsyncadd [#allocation6], %s26
      %s28 = sshll.u32 [#allocation5], 4
      %s29 = int_to_ptr.vmem [resolvable:$true] %s28
      %34 = dma.hbm_to_vmem [thread:$0]  %s1, 1024, %s29, [#allocation6], 64, 64, 4
    $region9: #{tpu_custom_call.1} parent=1 // pred_fallthru
      _
    // Predicated region
    $region10: #{tpu_custom_call.1} parent=1 // pred_check
      _
    $region11: #{tpu_custom_call.1} parent=1 // pred_check_branch
      %36 = sbr.rel (0) target = $region13
    $region12: #{tpu_custom_call.1} parent=1 // pred_region
      _
    $region13: #{tpu_custom_call.1} parent=1 // pred_fallthru
      _
    // Predicated region
    $region14: #{tpu_custom_call.1} parent=1 // pred_check
      _
    $region15: #{tpu_custom_call.1} parent=1 // pred_check_branch
      %38 = sbr.rel (0) target = $region17
    $region16: #{tpu_custom_call.1} parent=1 // pred_region
      %s40 = ssub.s32 1024, 1024
      %41 = vsyncadd [#allocation6], %s40
      %s42 = sshll.u32 [#allocation7], 4
      %s43 = int_to_ptr.vmem [resolvable:$true] %s42
      %48 = dma.hbm_to_vmem [thread:$0]  %s3, 1024, %s43, [#allocation6], 64, 64, 4
    $region17: #{tpu_custom_call.1} parent=1 // pred_fallthru
      _
    // Predicated region
    $region18: #{tpu_custom_call.1} parent=1 // pred_check
      _
    $region19: #{tpu_custom_call.1} parent=1 // pred_check_branch
      %50 = sbr.rel (0) target = $region21
    $region20: #{tpu_custom_call.1} parent=1 // pred_region
      _
    $region21: #{tpu_custom_call.1} parent=1 // pred_fallthru
      _
    // Predicated region
    $region22: #{tpu_custom_call.1} parent=1 // pred_check
      _
    $region23: #{tpu_custom_call.1} parent=1 // pred_check_branch
      %52 = sbr.rel (0) target = $region25
    $region24: #{tpu_custom_call.1} parent=1 // pred_region
      %53 = dma.done [#allocation3], 64
    $region25: #{tpu_custom_call.1} parent=1 // pred_fallthru
      _
    // Predicated region
    $region26: #{tpu_custom_call.1} parent=1 // pred_check
      _
    $region27: #{tpu_custom_call.1} parent=1 // pred_check_branch
      %55 = sbr.rel (0) target = $region29
    $region28: #{tpu_custom_call.1} parent=1 // pred_region
      %56 = dma.done [#allocation6], 1024
    $region29: #{tpu_custom_call.1} parent=1 // pred_fallthru
      _
    // Predicated region
    $region30: #{tpu_custom_call.1} parent=1 // pred_check
      _
    $region31: #{tpu_custom_call.1} parent=1 // pred_check_branch
      %58 = sbr.rel (0) target = $region33
    $region32: #{tpu_custom_call.1} parent=1 // pred_region
      %59 = dma.done [#allocation6], 1024
    $region33: #{tpu_custom_call.1} parent=1 // pred_fallthru
      _
    %v61 = vld [vmem:[#allocation2] sm:$0xf]
    %v62 = vld [vmem:[#allocation5] sm:$0xf]
    %v63 = vld [vmem:[#allocation5 + $0x4] sm:$0xf]
    %v64 = vld [vmem:[#allocation5 + $0x8] sm:$0xf]
    %v65 = vld [vmem:[#allocation5 + $0xc] sm:$0xf]
    %v66 = vld [vmem:[#allocation5 + $0x10] sm:$0xf]
    %v67 = vld [vmem:[#allocation5 + $0x14] sm:$0xf]
    %v68 = vld [vmem:[#allocation5 + $0x18] sm:$0xf]
    %v69 = vld [vmem:[#allocation5 + $0x1c] sm:$0xf]
    %v70 = vld [vmem:[#allocation5 + $0x20] sm:$0xf]
    %v71 = vld [vmem:[#allocation5 + $0x24] sm:$0xf]
    %v72 = vld [vmem:[#allocation5 + $0x28] sm:$0xf]
    %v73 = vld [vmem:[#allocation5 + $0x2c] sm:$0xf]
    %v74 = vld [vmem:[#allocation5 + $0x30] sm:$0xf]
    %v75 = vld [vmem:[#allocation5 + $0x34] sm:$0xf]
    %v76 = vld [vmem:[#allocation5 + $0x38] sm:$0xf]
    %v77 = vld [vmem:[#allocation5 + $0x3c] sm:$0xf]
    %v78 = vld [vmem:[%s2] sm:$0x1]
    %v80 = vlaneseq
    %v81 = vshrl.u32 %v80, 7
    %v82 = vsub.s32 0, %v81
    %v83 = vrot.slane %v78, %v82
    %v101 = vunpack.c.l.b16 %v62
    %v102 = vunpack.c.l.b16 %v63
    %v103 = vunpack.c.l.b16 %v64
    %v104 = vunpack.c.l.b16 %v65
    %v105 = vunpack.c.l.b16 %v66
    %v106 = vunpack.c.l.b16 %v67
    %v107 = vunpack.c.l.b16 %v68
    %v108 = vunpack.c.l.b16 %v69
    %v109 = vunpack.c.l.b16 %v70
    %v110 = vunpack.c.l.b16 %v71
    %v111 = vunpack.c.l.b16 %v72
    %v112 = vunpack.c.l.b16 %v73
    %v113 = vunpack.c.l.b16 %v74
    %v114 = vunpack.c.l.b16 %v75
    %v115 = vunpack.c.l.b16 %v76
    %v116 = vunpack.c.l.b16 %v77
    %v117 = vpack.c.b16 %v102, %v101
    %v118 = vpack.c.b16 %v104, %v103
    %v119 = vpack.c.b16 %v106, %v105
    %v120 = vpack.c.b16 %v108, %v107
    %v121 = vpack.c.b16 %v110, %v109
    %v122 = vpack.c.b16 %v112, %v111
    %v123 = vpack.c.b16 %v114, %v113
    %v124 = vpack.c.b16 %v116, %v115
    %133 = vmatprep.subr.bf16.mxu0 0
    %134 = vmatpush1.bf16.msra.mxu0 %v117
    %135 = vmatprep.subr.bf16.mxu0 0
    %136 = vmatpush1.bf16.msra.mxu0 %v118
    %137 = vmatprep.subr.bf16.mxu0 0
    %138 = vmatpush1.bf16.msra.mxu0 %v119
    %139 = vmatprep.subr.bf16.mxu0 0
    %140 = vmatpush1.bf16.msra.mxu0 %v120
    %141 = vmatprep.subr.bf16.mxu0 0
    %142 = vmatpush1.bf16.msra.mxu0 %v121
    %143 = vmatprep.subr.bf16.mxu0 0
    %144 = vmatpush1.bf16.msra.mxu0 %v122
    %145 = vmatprep.subr.bf16.mxu0 0
    %146 = vmatpush1.bf16.msra.mxu0 %v123
    %147 = vmatprep.subr.bf16.mxu0 0
    %148 = vmatpush1.bf16.msra.mxu0 %v124
    %149 = vmatprep.subr.bf16.mxu0 0
    %150 = vmatpush1.bf16.msra.mxu0 0
    %151 = vmatprep.subr.bf16.mxu0 0
    %152 = vmatpush1.bf16.msra.mxu0 0
    %153 = vmatprep.subr.bf16.mxu0 0
    %154 = vmatpush1.bf16.msra.mxu0 0
    %155 = vmatprep.subr.bf16.mxu0 0
    %156 = vmatpush1.bf16.msra.mxu0 0
    %157 = vmatprep.subr.bf16.mxu0 0
    %158 = vmatpush1.bf16.msra.mxu0 0
    %159 = vmatprep.subr.bf16.mxu0 0
    %160 = vmatpush1.bf16.msra.mxu0 0
    %161 = vmatprep.subr.bf16.mxu0 0
    %162 = vmatpush1.bf16.msra.mxu0 0
    %163 = vmatprep.subr.bf16.mxu0 0
    %164 = vmatpush1.bf16.msra.mxu0 0
    %165 = vmatprep.mubr.bf16.mxu0 0
    %166 = vmatmul.mubr.bf16.gmra.mrb[0].mxu0 %v61
    %v167 = vpop.f32.mrb[0].mxu0
    %v168 = vadd.f32 %v83, %v167
    %v169 = vpop.f32.mrb[0].mxu0
    %v170 = vpop.f32.mrb[0].mxu0
    %v171 = vpop.f32.mrb[0].mxu0
    %172 = vdwg.mxu0
    %v173 = vxor.u32 %v168, 2147483648
    %v174 = vmul.f32 %v173, 1.442695
    %v175 = vpow.pop %v174
    %v176 = vadd.f32 %v175, 1.0
    %v177 = vrcp.pop %v176
    %v178 = vmul.f32 1.0, %v177
    %v179 = vpack.c.bf16 %v178, %v178
    %v180 = vld [vmem:[#allocation7] sm:$0xf]
    %v181 = vld [vmem:[#allocation7 + $0x4] sm:$0xf]
    %v182 = vld [vmem:[#allocation7 + $0x8] sm:$0xf]
    %v183 = vld [vmem:[#allocation7 + $0xc] sm:$0xf]
    %v184 = vld [vmem:[#allocation7 + $0x10] sm:$0xf]
    %v185 = vld [vmem:[#allocation7 + $0x14] sm:$0xf]
    %v186 = vld [vmem:[#allocation7 + $0x18] sm:$0xf]
    %v187 = vld [vmem:[#allocation7 + $0x1c] sm:$0xf]
    %v188 = vld [vmem:[#allocation7 + $0x20] sm:$0xf]
    %v189 = vld [vmem:[#allocation7 + $0x24] sm:$0xf]
    %v190 = vld [vmem:[#allocation7 + $0x28] sm:$0xf]
    %v191 = vld [vmem:[#allocation7 + $0x2c] sm:$0xf]
    %v192 = vld [vmem:[#allocation7 + $0x30] sm:$0xf]
    %v193 = vld [vmem:[#allocation7 + $0x34] sm:$0xf]
    %v194 = vld [vmem:[#allocation7 + $0x38] sm:$0xf]
    %v195 = vld [vmem:[#allocation7 + $0x3c] sm:$0xf]
    %v196 = vld [vmem:[%s4] sm:$0x1]
    %v198 = vlaneseq
    %v199 = vshrl.u32 %v198, 7
    %v200 = vsub.s32 0, %v199
    %v201 = vrot.slane %v196, %v200
    %v219 = vunpack.c.l.b16 %v180
    %v220 = vunpack.c.l.b16 %v181
    %v221 = vunpack.c.l.b16 %v182
    %v222 = vunpack.c.l.b16 %v183
    %v223 = vunpack.c.l.b16 %v184
    %v224 = vunpack.c.l.b16 %v185
    %v225 = vunpack.c.l.b16 %v186
    %v226 = vunpack.c.l.b16 %v187
    %v227 = vunpack.c.l.b16 %v188
    %v228 = vunpack.c.l.b16 %v189
    %v229 = vunpack.c.l.b16 %v190
    %v230 = vunpack.c.l.b16 %v191
    %v231 = vunpack.c.l.b16 %v192
    %v232 = vunpack.c.l.b16 %v193
    %v233 = vunpack.c.l.b16 %v194
    %v234 = vunpack.c.l.b16 %v195
    %v235 = vpack.c.b16 %v220, %v219
    %v236 = vpack.c.b16 %v222, %v221
    %v237 = vpack.c.b16 %v224, %v223
    %v238 = vpack.c.b16 %v226, %v225
    %v239 = vpack.c.b16 %v228, %v227
    %v240 = vpack.c.b16 %v230, %v229
    %v241 = vpack.c.b16 %v232, %v231
    %v242 = vpack.c.b16 %v234, %v233
    %251 = vmatprep.subr.bf16.mxu0 0
    %252 = vmatpush1.bf16.msra.mxu0 %v235
    %253 = vmatprep.subr.bf16.mxu0 0
    %254 = vmatpush1.bf16.msra.mxu0 %v236
    %255 = vmatprep.subr.bf16.mxu0 0
    %256 = vmatpush1.bf16.msra.mxu0 %v237
    %257 = vmatprep.subr.bf16.mxu0 0
    %258 = vmatpush1.bf16.msra.mxu0 %v238
    %259 = vmatprep.subr.bf16.mxu0 0
    %260 = vmatpush1.bf16.msra.mxu0 %v239
    %261 = vmatprep.subr.bf16.mxu0 0
    %262 = vmatpush1.bf16.msra.mxu0 %v240
    %263 = vmatprep.subr.bf16.mxu0 0
    %264 = vmatpush1.bf16.msra.mxu0 %v241
    %265 = vmatprep.subr.bf16.mxu0 0
    %266 = vmatpush1.bf16.msra.mxu0 %v242
    %267 = vmatprep.subr.bf16.mxu0 0
    %268 = vmatpush1.bf16.msra.mxu0 0
    %269 = vmatprep.subr.bf16.mxu0 0
    %270 = vmatpush1.bf16.msra.mxu0 0
    %271 = vmatprep.subr.bf16.mxu0 0
    %272 = vmatpush1.bf16.msra.mxu0 0
    %273 = vmatprep.subr.bf16.mxu0 0
    %274 = vmatpush1.bf16.msra.mxu0 0
    %275 = vmatprep.subr.bf16.mxu0 0
    %276 = vmatpush1.bf16.msra.mxu0 0
    %277 = vmatprep.subr.bf16.mxu0 0
    %278 = vmatpush1.bf16.msra.mxu0 0
    %279 = vmatprep.subr.bf16.mxu0 0
    %280 = vmatpush1.bf16.msra.mxu0 0
    %281 = vmatprep.subr.bf16.mxu0 0
    %282 = vmatpush1.bf16.msra.mxu0 0
    %283 = vmatprep.mubr.bf16.mxu0 0
    %284 = vmatmul.mubr.bf16.gmra.mrb[0].mxu0 %v179
    %v285 = vpop.f32.mrb[0].mxu0
    %v286 = vadd.f32 %v201, %v285
    %v287 = vpop.f32.mrb[0].mxu0
    %v288 = vpop.f32.mrb[0].mxu0
    %v289 = vpop.f32.mrb[0].mxu0
    %290 = vdwg.mxu0
    %v291 = vxor.u32 %v286, 2147483648
    %v292 = vmul.f32 %v291, 1.442695
    %v293 = vpow.pop %v292
    %v294 = vadd.f32 %v293, 1.0
    %v295 = vrcp.pop %v294
    %v296 = vmul.f32 1.0, %v295
    %297 = vst [vmem:[#allocation8] sm:$0xff] %v296
    // Predicated region
    $region34: #{tpu_custom_call.1} parent=1 // pred_check
      _
    $region35: #{tpu_custom_call.1} parent=1 // pred_check_branch
      %299 = sbr.rel (0) target = $region37
    $region36: #{tpu_custom_call.1} parent=1 // pred_region
      %s301 = ssub.s32 128, 128
      %302 = vsyncadd [#allocation4], %s301
      %s304 = sshll.u32 [#allocation8], 4
      %s305 = int_to_ptr.vmem [resolvable:$true] %s304
      %307 = dma.vmem_to_hbm [thread:$0]  %s305, 128, %s5, [#allocation4]
    $region37: #{tpu_custom_call.1} parent=1 // pred_fallthru
      _
    // Predicated region
    $region38: #{tpu_custom_call.1} parent=1 // pred_check
      _
    $region39: #{tpu_custom_call.1} parent=1 // pred_check_branch
      %309 = sbr.rel (0) target = $region41
    $region40: #{tpu_custom_call.1} parent=1 // pred_region
      %310 = dma.done [#allocation4], 128
    $region41: #{tpu_custom_call.1} parent=1 // pred_fallthru
      _
    %311 = vsyncpa [#allocation3], 1
    %312 = vsyncpa [#allocation6], 1
    %313 = vsyncpa [#allocation4], 1

</llo_original>
